<compile_context>
chip_gen: v5e
topology: v5e:2x2
jax: 0.10.0
libtpu: 0.0.40
codegen_flags: <defaults>
</compile_context>

<pallas_src>
import jax
import jax.numpy as jnp
from jax.experimental import pallas as pl
from jax.experimental.pallas import tpu as pltpu

# Problem sizes (small, consistent with Conv2d(1, 20, 5))
N = 2           # batch
C_IN = 1        # in channels
C_OUT = 20      # out channels
K = 5           # kernel size
H = 16
W = 16
OH = H - K + 1  # 12
OW = W - K + 1  # 12


def conv2d_matmul_kernel(p_ref, w_ref, b_ref, o_ref):
    # p_ref: (K*K, N*OH*OW)  im2col patch matrix (lane-dense, built in wrapper)
    # w_ref: (C_OUT, K*K)    weight matrix (in_channels == 1)
    # b_ref: (C_OUT, 1)      bias column
    # o_ref: (C_OUT, N*OH*OW) lane-dense output
    out = jnp.dot(w_ref[...], p_ref[...], preferred_element_type=jnp.float32)
    o_ref[...] = (out + b_ref[...]).astype(o_ref.dtype)


def conv2d_pallas(x, weight, bias):
    """x: (N, 1, H, W) f32; weight: (C_OUT, 1, K, K) f32; bias: (C_OUT,) f32.

    Returns (N, C_OUT, OH, OW) f32, identical to PyTorch Conv2d(1, 20, 5)."""
    # ---- wrapper-side im2col (layout plumbing, handled by XLA) ----
    img = x[:, 0]  # (N, H, W) since C_IN == 1
    # taps[ki*K + kj] = img[:, ki:ki+OH, kj:kj+OW]; ordering matches
    # weight.reshape(C_OUT, K*K) row-major flattening of (C_IN=1, K, K).
    taps = jnp.stack(
        [img[:, ki:ki + OH, kj:kj + OW] for ki in range(K) for kj in range(K)],
        axis=0)                                      # (K*K, N, OH, OW)
    patches = taps.reshape(K * K, N * OH * OW)        # (25, 288) lane-dense

    w_mat = weight.reshape(C_OUT, C_IN * K * K)       # (20, 25)
    b_col = bias.reshape(C_OUT, 1)                    # (20, 1)

    # Whole working set is a few KB -> single kernel invocation, no grid.
    out_flat = pl.pallas_call(
        conv2d_matmul_kernel,
        out_shape=jax.ShapeDtypeStruct((C_OUT, N * OH * OW), jnp.float32),
        in_specs=[
            pl.BlockSpec(memory_space=pltpu.MemorySpace.VMEM),
            pl.BlockSpec(memory_space=pltpu.MemorySpace.VMEM),
            pl.BlockSpec(memory_space=pltpu.MemorySpace.VMEM),
        ],
        out_specs=pl.BlockSpec(memory_space=pltpu.MemorySpace.VMEM),
    )(patches, w_mat, b_col)

    # ---- back to NCHW outside the kernel ----
    out = out_flat.reshape(C_OUT, N, OH, OW).transpose(1, 0, 2, 3)
    return out


if __name__ == "__main__":
    key = jax.random.PRNGKey(0)
    kx, kw, kb = jax.random.split(key, 3)

    # Deterministic parameter init (uniform in +/- 1/sqrt(fan_in), like PyTorch default)
    fan_in = C_IN * K * K
    bound = 1.0 / (fan_in ** 0.5)
    weight = jax.random.uniform(kw, (C_OUT, C_IN, K, K), jnp.float32,
                                minval=-bound, maxval=bound)
    bias = jax.random.uniform(kb, (C_OUT,), jnp.float32,
                              minval=-bound, maxval=bound)

    x = jax.random.normal(kx, (N, C_IN, H, W), jnp.float32)

    out = jax.jit(conv2d_pallas)(x, weight, bias)
    out = jax.block_until_ready(out)

    # Sanity check against XLA's conv (pure JAX reference).
    ref = jax.lax.conv_general_dilated(
        x, weight, window_strides=(1, 1), padding="VALID",
        dimension_numbers=("NCHW", "OIHW", "NCHW")) + bias.reshape(1, C_OUT, 1, 1)
    assert out.shape == (N, C_OUT, OH, OW)
    assert jnp.allclose(out, ref, atol=1e-4, rtol=1e-4)

    print("KERNEL_OK")
</pallas_src>

<mosaic_0001>
module attributes {stable_mosaic.version = 11 : i64} {
  func.func @conv2d_matmul_kernel(%arg0: memref<25x288xf32, #tpu.memory_space<vmem>>, %arg1: memref<20x25xf32, #tpu.memory_space<vmem>>, %arg2: memref<20x1xf32, #tpu.memory_space<vmem>>, %arg3: memref<20x288xf32, #tpu.memory_space<vmem>>) attributes {dimension_semantics = [], scalar_prefetch = 0 : i64, scratch_operands = 0 : i64, tpu.core_type = #tpu.core_type<tc>} {
    %c0 = arith.constant 0 : index
    %c0_0 = arith.constant 0 : index
    %0 = vector.load %arg1[%c0, %c0_0] : memref<20x25xf32, #tpu.memory_space<vmem>>, vector<20x25xf32>
    %c0_1 = arith.constant 0 : index
    %c0_2 = arith.constant 0 : index
    %1 = vector.load %arg0[%c0_1, %c0_2] : memref<25x288xf32, #tpu.memory_space<vmem>>, vector<25x288xf32>
    %cst = arith.constant dense<0.000000e+00> : vector<20x288xf32>
    %2 = tpu.matmul %0, %1, %cst {dimension_numbers = #tpu.dot_dimension_numbers<[1], [0], [0], [1], [0, 0, 1, 1], [], []>} : vector<20x25xf32>, vector<25x288xf32>, vector<20x288xf32> -> vector<20x288xf32>
    %c0_3 = arith.constant 0 : index
    %c0_4 = arith.constant 0 : index
    %3 = vector.load %arg2[%c0_3, %c0_4] : memref<20x1xf32, #tpu.memory_space<vmem>>, vector<20x1xf32>
    %4 = vector.broadcast %3 : vector<20x1xf32> to vector<20x288xf32>
    %5 = arith.addf %2, %4 : vector<20x288xf32>
    %c0_5 = arith.constant 0 : index
    %c0_6 = arith.constant 0 : index
    %6 = vector.load %arg3[%c0_5, %c0_6] : memref<20x288xf32, #tpu.memory_space<vmem>>, vector<20x288xf32>
    tpu.vector_store %arg3[%c0_5, %c0_6], %5 {strides = array<i32>} : memref<20x288xf32, #tpu.memory_space<vmem>>, vector<20x288xf32>,
    return
  }
}

</mosaic_0001>

<llo_original>
// kernel: conv2d_pallas.1
$region0: #{conv2d_pallas.1}
  #allocation0 [shape = 'u32[]', space=smem, size = 0x4, offset = 0x4, fixed_abs, tag = 'smem constant byte address 0x4 - core index']
  #allocation1 [shape = 'u32[72,128]{1,0:T(1,128)}', space=vmem, size = 0x9000, scoped, tag = 'internal scratch']
  %s0 = inlined_call_operand.vmem [shape: f32[25,288], index: 0, kind: input, shape index: {}]
  %s1 = inlined_call_operand.vmem [shape: f32[20,25], index: 1, kind: input, shape index: {}]
  %s2 = inlined_call_operand.vmem [shape: f32[20,1], index: 2, kind: input, shape index: {}]
  %s3 = inlined_call_operand.vmem [shape: f32[20,288], index: 3, kind: output, shape index: {}]
  %s4 = sld [smem:[#allocation0]]
  $region22: #{conv2d_pallas.1} parent=0
    _
  %s6 = ssub.s32 1, %s4
  %s7 = scalar_select 0, %s6, %s4
  // Predicated region
  $region2: #{conv2d_pallas.1} parent=0 // pred_check
    _
  $region3: #{conv2d_pallas.1} parent=0 // pred_check_branch
    %9 = sbr.rel (0) target = $region5
  $region4: #{conv2d_pallas.1} parent=0 // pred_region
    _
  $region5: #{conv2d_pallas.1} parent=0 // pred_fallthru
    _
  // Predicated region
  $region6: #{conv2d_pallas.1} parent=0 // pred_check
    _
  $region7: #{conv2d_pallas.1} parent=0 // pred_check_branch
    %11 = sbr.rel (0) target = $region9
  $region8: #{conv2d_pallas.1} parent=0 // pred_region
    _
  $region9: #{conv2d_pallas.1} parent=0 // pred_fallthru
    _
  // Predicated region
  $region10: #{conv2d_pallas.1} parent=0 // pred_check
    _
  $region11: #{conv2d_pallas.1} parent=0 // pred_check_branch
    %13 = sbr.rel (0) target = $region13
  $region12: #{conv2d_pallas.1} parent=0 // pred_region
    _
  $region13: #{conv2d_pallas.1} parent=0 // pred_fallthru
    _
  %v14 = vld [vmem:[%s1] sm:$0xff]
  %v15 = vld [vmem:[%s1 + $0x8] sm:$0xff]
  %v16 = vld [vmem:[%s1 + $0x10] sm:$0xf]
  %v17 = vld [vmem:[%s0] sm:$0xff]
  %v18 = vld [vmem:[%s0 + $0x8] sm:$0xff]
  %v19 = vld [vmem:[%s0 + $0x10] sm:$0xff]
  %v20 = vld [vmem:[%s0 + $0x18] sm:$0xff]
  %v21 = vld [vmem:[%s0 + $0x20] sm:$0xff]
  %v22 = vld [vmem:[%s0 + $0x28] sm:$0xff]
  %v23 = vld [vmem:[%s0 + $0x30] sm:$0xff]
  %v24 = vld [vmem:[%s0 + $0x38] sm:$0xff]
  %v25 = vld [vmem:[%s0 + $0x40] sm:$0xff]
  %v26 = vld [vmem:[%s0 + $0x48] sm:$0x1]
  %v27 = vld [vmem:[%s0 + $0x50] sm:$0x1]
  %v28 = vld [vmem:[%s0 + $0x58] sm:$0x1]
  %v29 = vld [vmem:[%s2] sm:$0xff]
  %v30 = vld [vmem:[%s2 + $0x8] sm:$0xff]
  %v31 = vld [vmem:[%s2 + $0x10] sm:$0xf]
  %33 = vset.pattern.permute.xlu0 0
  %34 = vperm.xlu0 %33, %v29
  %v35 = vpop.permute.xlu0 %34
  %38 = vset.pattern.permute.xlu0 0
  %39 = vperm.xlu0 %38, %v30
  %v40 = vpop.permute.xlu0 %39
  %43 = vset.pattern.permute.xlu0 0
  %44 = vperm.xlu0 %43, %v31
  %v45 = vpop.permute.xlu0 %44
  %vm47 = vcmask 203776
  %v49 = vsel %vm47, %v14, 0
  %v52 = vsel %vm47, %v15, 0
  %v55 = vsel %vm47, %v16, 0
  %vm57 = vcmask 1040384
  %v59 = vsel %vm57, %v26, 0
  %v62 = vsel %vm57, %v27, 0
  %v65 = vsel %vm57, %v28, 0
  %67 = vmatpush.msra.mxu0 0.0
  %68 = vmatpush.msra.mxu0 0.0
  %69 = vmatpush.msra.mxu0 0.0
  %70 = vmatpush.msra.mxu0 0.0
  %71 = vmatpush.msra.mxu0 0.0
  %72 = vmatpush.msra.mxu0 0.0
  %73 = vmatpush.msra.mxu0 0.0
  %74 = vmatpush.msra.mxu0 0.0
  %75 = vmatpush.msra.mxu0 0.0
  %76 = vmatpush.msra.mxu0 0.0
  %77 = vmatpush.msra.mxu0 0.0
  %78 = vmatpush.msra.mxu0 0.0
  %79 = vmatpush.msra.mxu0 %v59
  %80 = vmatpush.msra.mxu0 %v23
  %81 = vmatpush.msra.mxu0 %v20
  %82 = vmatpush.msra.mxu0 %v17
  %83 = vmatmul.f32.gmra.mxu0 %v49
  %v84 = vpop.f32.mrf.mxu0
  %v85 = vadd.f32 %v35, %v84
  %86 = vmatmul.f32.gmra.mxu0 %v52
  %v87 = vpop.f32.mrf.mxu0
  %v88 = vadd.f32 %v40, %v87
  %89 = vmatmul.f32.gmra.mxu0 %v55
  %v90 = vpop.f32.mrf.mxu0
  %v91 = vadd.f32 %v45, %v90
  %92 = vdwg.mxu0
  %93 = vmatpush.msra.mxu0 0.0
  %94 = vmatpush.msra.mxu0 0.0
  %95 = vmatpush.msra.mxu0 0.0
  %96 = vmatpush.msra.mxu0 0.0
  %97 = vmatpush.msra.mxu0 0.0
  %98 = vmatpush.msra.mxu0 0.0
  %99 = vmatpush.msra.mxu0 0.0
  %100 = vmatpush.msra.mxu0 0.0
  %101 = vmatpush.msra.mxu0 0.0
  %102 = vmatpush.msra.mxu0 0.0
  %103 = vmatpush.msra.mxu0 0.0
  %104 = vmatpush.msra.mxu0 0.0
  %105 = vmatpush.msra.mxu0 %v62
  %106 = vmatpush.msra.mxu0 %v24
  %107 = vmatpush.msra.mxu0 %v21
  %108 = vmatpush.msra.mxu0 %v18
  %109 = vmatmul.f32.gmra.mxu0 %v49
  %v110 = vpop.f32.mrf.mxu0
  %v111 = vadd.f32 %v35, %v110
  %112 = vmatmul.f32.gmra.mxu0 %v52
  %v113 = vpop.f32.mrf.mxu0
  %v114 = vadd.f32 %v40, %v113
  %115 = vmatmul.f32.gmra.mxu0 %v55
  %v116 = vpop.f32.mrf.mxu0
  %v117 = vadd.f32 %v45, %v116
  %118 = vdwg.mxu0
  %119 = vmatpush.msra.mxu0 0.0
  %120 = vmatpush.msra.mxu0 0.0
  %121 = vmatpush.msra.mxu0 0.0
  %122 = vmatpush.msra.mxu0 0.0
  %123 = vmatpush.msra.mxu0 0.0
  %124 = vmatpush.msra.mxu0 0.0
  %125 = vmatpush.msra.mxu0 0.0
  %126 = vmatpush.msra.mxu0 0.0
  %127 = vmatpush.msra.mxu0 0.0
  %128 = vmatpush.msra.mxu0 0.0
  %129 = vmatpush.msra.mxu0 0.0
  %130 = vmatpush.msra.mxu0 0.0
  %131 = vmatpush.msra.mxu0 %v65
  %132 = vmatpush.msra.mxu0 %v25
  %133 = vmatpush.msra.mxu0 %v22
  %134 = vmatpush.msra.mxu0 %v19
  %135 = vmatmul.f32.gmra.mxu0 %v49
  %v136 = vpop.f32.mrf.mxu0
  %v137 = vadd.f32 %v35, %v136
  %138 = vmatmul.f32.gmra.mxu0 %v52
  %v139 = vpop.f32.mrf.mxu0
  %v140 = vadd.f32 %v40, %v139
  %141 = vmatmul.f32.gmra.mxu0 %v55
  %v142 = vpop.f32.mrf.mxu0
  %v143 = vadd.f32 %v45, %v142
  %144 = vdwg.mxu0
  %145 = vst [vmem:[%s3] sm:$0xff] %v85
  %146 = vst [vmem:[%s3 + $0x8] sm:$0xff] %v111
  %vm147 = vcmask 261120
  %148 = vst.msk [vmem:[%s3 + $0x10] sm:$0xff] %vm147, %v137
  %149 = vst [vmem:[%s3 + $0x18] sm:$0xff] %v88
  %150 = vst [vmem:[%s3 + $0x20] sm:$0xff] %v114
  %151 = vst.msk [vmem:[%s3 + $0x28] sm:$0xff] %vm147, %v140
  %152 = vst [vmem:[%s3 + $0x30] sm:$0xf] %v91
  %153 = vst [vmem:[%s3 + $0x38] sm:$0xf] %v117
  %vm154 = vcmask 257024
  %155 = vst.msk [vmem:[%s3 + $0x40] sm:$0xf] %vm154, %v143
  // Predicated region
  $region14: #{conv2d_pallas.1} parent=0 // pred_check
    _
  $region15: #{conv2d_pallas.1} parent=0 // pred_check_branch
    %157 = sbr.rel (0) target = $region17
  $region16: #{conv2d_pallas.1} parent=0 // pred_region
    _
  $region17: #{conv2d_pallas.1} parent=0 // pred_fallthru
    _
  // Predicated region
  $region18: #{conv2d_pallas.1} parent=0 // pred_check
    _
  $region19: #{conv2d_pallas.1} parent=0 // pred_check_branch
    %159 = sbr.rel (0) target = $region21
  $region20: #{conv2d_pallas.1} parent=0 // pred_region
    _
  $region21: #{conv2d_pallas.1} parent=0 // pred_fallthru
    _

</llo_original>
